<compile_context>
chip_gen: v7x
topology: tpu7x:2x2x1
jax: 0.10.0
libtpu: 0.0.40
codegen_flags: <defaults>
</compile_context>

<pallas_src>
import math

import jax
import jax.numpy as jnp
import numpy as np
from jax.experimental import pallas as pl
from jax.experimental.pallas import tpu as pltpu


# ----------------------------------------------------------------------------
# Parameter / buffer setup (matches PyTorch __init__ exactly).
# ----------------------------------------------------------------------------
def make_positional_table(d_model: int, max_len: int = 7500) -> jnp.ndarray:
    position = jnp.arange(max_len, dtype=jnp.float32)[:, None]            # [max_len, 1]
    div_term = jnp.exp(
        jnp.arange(0, d_model, 2, dtype=jnp.float32) * (-math.log(10000.0) / d_model)
    )                                                                      # [d_model/2]
    pe = jnp.zeros((max_len, 1, d_model), dtype=jnp.float32)
    pe = pe.at[:, 0, 0::2].set(jnp.sin(position * div_term))
    pe = pe.at[:, 0, 1::2].set(jnp.cos(position * div_term))
    return pe                                                              # [max_len, 1, d_model]


# ----------------------------------------------------------------------------
# Kernels.
# ----------------------------------------------------------------------------
def _broadcast_pe(pe_tile: jnp.ndarray, batch: int) -> jnp.ndarray:
    # pe_tile: (tile_s, D) -> (tile_s, B*D), replicated along lanes so it
    # lines up with x laid out as [s, b*D + d].
    if batch == 1:
        return pe_tile
    return jnp.tile(pe_tile, (1, batch))


def _make_add_pe_kernel(batch: int):
    def kernel(x_ref, pe_ref, o_ref):
        # eval-mode forward: x + pe (dropout is identity in eval).
        o_ref[...] = x_ref[...] + _broadcast_pe(pe_ref[...], batch)
    return kernel


def _make_add_pe_dropout_kernel(p: float, batch: int, seed: int):
    keep_scale = np.float32(1.0 / (1.0 - p))
    # compare the low 24 hashed bits against an integer threshold: keep iff
    # bits >= p * 2^24  (P(keep) = 1 - p).
    threshold = np.int32(int(round(p * float(1 << 24))))
    seed_u32 = np.uint32(seed & 0xFFFFFFFF)

    def kernel(x_ref, pe_ref, o_ref):
        ts, lanes = x_ref.shape                       # static block shape
        y = x_ref[...] + _broadcast_pe(pe_ref[...], batch)

        # Stateless counter-based RNG: hash of the global element index.
        # (Works on TPU and in interpret mode; mask independent of tile size.)
        row = jax.lax.broadcasted_iota(jnp.int32, (ts, lanes), 0).astype(jnp.uint32)
        col = jax.lax.broadcasted_iota(jnp.int32, (ts, lanes), 1).astype(jnp.uint32)
        base_row = (pl.program_id(0) * ts).astype(jnp.uint32)
        gid = (base_row + row) * jnp.uint32(lanes) + col

        h = gid ^ seed_u32                            # splitmix32-style mixer
        h = (h ^ (h >> 16)) * jnp.uint32(0x7FEB352D)
        h = (h ^ (h >> 15)) * jnp.uint32(0x846CA68B)
        h = h ^ (h >> 16)

        r24 = (h & jnp.uint32(0x00FFFFFF)).astype(jnp.int32)
        keep = r24 >= threshold
        o_ref[...] = jnp.where(keep, y * keep_scale, jnp.float32(0.0)).astype(o_ref.dtype)

    return kernel


# ----------------------------------------------------------------------------
# Wrapper.
# ----------------------------------------------------------------------------
def _choose_tile_s(S: int, row_bytes: int, target_bytes: int = 4 << 20) -> int:
    """Pick rows/block so an x block is ~4 MiB (HBM-roofline territory, per-step
    overhead amortised) while double-buffered x+pe+out fits comfortably inside
    the raised scoped-VMEM limit on every chip."""
    t = target_bytes // max(row_bytes, 1)
    if t >= S:
        return S                       # one full-extent block
    t = max(8, (t // 8) * 8)           # leading block dim must be a multiple of 8
    return min(t, S)


def positional_encoding(
    x: jnp.ndarray,
    pe: jnp.ndarray,
    *,
    p: float = 0.1,
    training: bool = False,
    seed: int = 0,
) -> jnp.ndarray:
    """x: [S, B, D] float32.  pe: [max_len, 1, D].  Returns [S, B, D]."""
    S, B, D = x.shape
    L = B * D

    x2 = x.reshape(S, L)               # contiguous -> free reshape; [s, b*D + d]
    pe2 = pe[:S, 0, :]                 # [S, D]  (the pe[:x.size(0)] slice)

    tile_s = _choose_tile_s(S, L * x.dtype.itemsize)
    grid = (pl.cdiv(S, tile_s),)

    x_spec = pl.BlockSpec((tile_s, L), lambda i: (i, 0))
    pe_spec = pl.BlockSpec((tile_s, D), lambda i: (i, 0))
    out_spec = pl.BlockSpec((tile_s, L), lambda i: (i, 0))
    out_shape = jax.ShapeDtypeStruct((S, L), x.dtype)
    cp = pltpu.CompilerParams(
        dimension_semantics=("parallel",),
        vmem_limit_bytes=64 << 20,     # headroom for big double-buffered tiles
    )

    if training and p > 0.0:
        kernel = _make_add_pe_dropout_kernel(p, B, seed)
    else:
        kernel = _make_add_pe_kernel(B)

    out2 = pl.pallas_call(
        kernel,
        out_shape=out_shape,
        grid_spec=pltpu.PrefetchScalarGridSpec(
            num_scalar_prefetch=0,
            grid=grid,
            in_specs=[x_spec, pe_spec],
            out_specs=out_spec,
        ),
        compiler_params=cp,
    )(x2, pe2)

    return out2.reshape(S, B, D)


# ----------------------------------------------------------------------------
# Main.
# ----------------------------------------------------------------------------
if __name__ == "__main__":
    S, B, D = 8, 2, 32                  # seq_len, batch, d_model
    P_DROP = 0.1
    key = jax.random.PRNGKey(0)
    x = jax.random.normal(key, (S, B, D), dtype=jnp.float32)

    pe = make_positional_table(d_model=D, max_len=7500)
    ref = np.asarray(x + pe[:S])        # eval-mode reference (dropout = identity)

    # Eval-mode forward: must match x + pe[:S] exactly.
    out_eval = jax.block_until_ready(positional_encoding(x, pe, p=P_DROP, training=False))
    np.testing.assert_allclose(np.asarray(out_eval), ref, rtol=1e-6, atol=1e-6)

    # Training-mode forward (stochastic inverted dropout inside the kernel).
    out_train = jax.block_until_ready(
        positional_encoding(x, pe, p=P_DROP, training=True, seed=0)
    )
    assert out_train.shape == (S, B, D)
    ot = np.asarray(out_train)
    assert np.all(np.isfinite(ot))
    # Every element must be either dropped (0) or the kept value scaled by 1/(1-p).
    scaled = ref / (1.0 - P_DROP)
    ok = np.isclose(ot, 0.0, atol=1e-6) | np.isclose(ot, scaled, rtol=1e-5, atol=1e-6)
    assert ok.all()
    # Loose sanity check on the drop rate (p=0.1 over 512 elements).
    n_dropped = int(np.sum(np.isclose(ot, 0.0, atol=1e-6) & ~np.isclose(scaled, 0.0, atol=1e-6)))
    assert 0 < n_dropped < int(0.35 * ot.size)

    print("KERNEL_OK")
</pallas_src>

<mosaic_0001>
module attributes {stable_mosaic.version = 11 : i64} {
  func.func @kernel(%arg0: i32, %arg1: memref<8x64xf32, #tpu.memory_space<vmem>>, %arg2: memref<8x32xf32, #tpu.memory_space<vmem>>, %arg3: memref<8x64xf32, #tpu.memory_space<vmem>>) attributes {dimension_semantics = [#tpu.dimension_semantics<parallel>], iteration_bounds = array<i64: 1>, scalar_prefetch = 0 : i64, scratch_operands = 0 : i64, tpu.core_type = #tpu.core_type<tc>, window_params = [{transform_indices = @transform_0, window_bounds = array<i64: 8, 64>}, {transform_indices = @transform_1, window_bounds = array<i64: 8, 32>}, {transform_indices = @transform_2, window_bounds = array<i64: 8, 64>}]} {
    %c0 = arith.constant 0 : index
    %c0_0 = arith.constant 0 : index
    %0 = vector.load %arg1[%c0, %c0_0] : memref<8x64xf32, #tpu.memory_space<vmem>>, vector<8x64xf32>
    %c0_1 = arith.constant 0 : index
    %c0_2 = arith.constant 0 : index
    %1 = vector.load %arg2[%c0_1, %c0_2] : memref<8x32xf32, #tpu.memory_space<vmem>>, vector<8x32xf32>
    %2 = tpu.concatenate %1, %1 in 1 : vector<8x32xf32>, vector<8x32xf32> -> vector<8x64xf32>
    %3 = arith.addf %0, %2 : vector<8x64xf32>
    %c0_3 = arith.constant 0 : index
    %c0_4 = arith.constant 0 : index
    %4 = vector.load %arg3[%c0_3, %c0_4] : memref<8x64xf32, #tpu.memory_space<vmem>>, vector<8x64xf32>
    tpu.vector_store %arg3[%c0_3, %c0_4], %3 {strides = array<i32>} : memref<8x64xf32, #tpu.memory_space<vmem>>, vector<8x64xf32>,
    return
  }
  func.func @transform_0(%arg0: i32) -> (i32, i32) {
    %c0_i32 = arith.constant 0 : i32
    %c0_i32_0 = arith.constant 0 : i32
    return %arg0, %c0_i32 : i32, i32
  }
  func.func @transform_1(%arg0: i32) -> (i32, i32) {
    %c0_i32 = arith.constant 0 : i32
    %c0_i32_0 = arith.constant 0 : i32
    return %arg0, %c0_i32 : i32, i32
  }
  func.func @transform_2(%arg0: i32) -> (i32, i32) {
    %c0_i32 = arith.constant 0 : i32
    %c0_i32_0 = arith.constant 0 : i32
    return %arg0, %c0_i32 : i32, i32
  }
}

</mosaic_0001>

<llo_original>
// kernel: tpu_custom_call.1
$region0: #{tpu_custom_call.1}
  #allocation0 [shape = 'u32[]', space=smem, size = 0x4, offset = 0x4, fixed_abs, tag = 'smem constant byte address 0x4 - core index']
  #allocation1 [shape = 'u32[144,128]{1,0:T(1,128)}', space=vmem, size = 0x12000, scoped, tag = 'internal scratch']
  %s0 = inlined_call_operand.hbm [shape: f32[8,64], index: 0, kind: input, shape index: {}]
  %s1 = inlined_call_operand.hbm [shape: f32[8,32], index: 1, kind: input, shape index: {}]
  %s2 = inlined_call_operand.hbm [shape: f32[8,64], index: 2, kind: output, shape index: {}]
  %s3 = sld [smem:[#allocation0]]
  $region26: #{tpu_custom_call.1} parent=0
    _
  %s5 = ssub.s32 1, %s3
  %s6 = scalar_select 0, %s5, %s3
  $region1: #{tpu_custom_call.1} parent=0
    #allocation2 [shape = 'u8[4096]{0}', space=vmem, size = 0x1000, scoped, tag = 'input window, operand 0, single buffered']
    #allocation3 [shape = 's32[1]{0}', space=sflag, size = 0x4, scoped, tag = 'scoped memory for tpu_custom_call.1']
    #allocation4 [shape = 's32[1]{0}', space=sflag, size = 0x4, scoped, tag = 'scoped memory for tpu_custom_call.1']
    #allocation5 [shape = 'u8[4096]{0}', space=vmem, size = 0x1000, scoped, tag = 'input window, operand 1, single buffered']
    #allocation6 [shape = 's32[1]{0}', space=sflag, size = 0x4, scoped, tag = 'scoped memory for tpu_custom_call.1']
    #allocation7 [shape = 'u8[4096]{0}', space=vmem, size = 0x1000, scoped, tag = 'output window, operand 0, single buffered']
    %7 = vsyncpa [#allocation3], 0
    %8 = vsyncpa [#allocation6], 0
    %9 = vsyncpa [#allocation4], 0
    // Predicated region
    $region2: #{tpu_custom_call.1} parent=1 // pred_check
      _
    $region3: #{tpu_custom_call.1} parent=1 // pred_check_branch
      %11 = sbr.rel (0) target = $region5
    $region4: #{tpu_custom_call.1} parent=1 // pred_region
      %s13 = ssub.s32 128, 128
      %14 = vsyncadd [#allocation3], %s13
      %s16 = sshll.u32 [#allocation2], 4
      %s17 = int_to_ptr.vmem [resolvable:$true] %s16
      %19 = dma.hbm_to_vmem [thread:$0]  %s0, 128, %s17, [#allocation3]
    $region5: #{tpu_custom_call.1} parent=1 // pred_fallthru
      _
    // Predicated region
    $region6: #{tpu_custom_call.1} parent=1 // pred_check
      _
    $region7: #{tpu_custom_call.1} parent=1 // pred_check_branch
      %21 = sbr.rel (0) target = $region9
    $region8: #{tpu_custom_call.1} parent=1 // pred_region
      %s23 = ssub.s32 128, 128
      %24 = vsyncadd [#allocation6], %s23
      %s26 = sshll.u32 [#allocation5], 4
      %s27 = int_to_ptr.vmem [resolvable:$true] %s26
      %29 = dma.hbm_to_vmem [thread:$0]  %s1, 128, %s27, [#allocation6]
    $region9: #{tpu_custom_call.1} parent=1 // pred_fallthru
      _
    // Predicated region
    $region10: #{tpu_custom_call.1} parent=1 // pred_check
      _
    $region11: #{tpu_custom_call.1} parent=1 // pred_check_branch
      %31 = sbr.rel (0) target = $region13
    $region12: #{tpu_custom_call.1} parent=1 // pred_region
      %32 = dma.done [#allocation3], 128
    $region13: #{tpu_custom_call.1} parent=1 // pred_fallthru
      _
    // Predicated region
    $region14: #{tpu_custom_call.1} parent=1 // pred_check
      _
    $region15: #{tpu_custom_call.1} parent=1 // pred_check_branch
      %34 = sbr.rel (0) target = $region17
    $region16: #{tpu_custom_call.1} parent=1 // pred_region
      %35 = dma.done [#allocation6], 128
    $region17: #{tpu_custom_call.1} parent=1 // pred_fallthru
      _
    %v36 = vld [vmem:[#allocation2] sm:$0xff]
    %v37 = vld [vmem:[#allocation5] sm:$0xff]
    %39 = vrot.lane.b32.xlu0 %v37, 32
    %v40 = vpop.permute.xlu0 %39
    %vm42 = vcmask 261120
    %v43 = vsel %vm42, %v37, %v40
    %v44 = vadd.f32 %v36, %v43
    %vm45 = vcmask 523264
    %46 = vst.msk [vmem:[#allocation7] sm:$0xff] %vm45, %v44
    // Predicated region
    $region18: #{tpu_custom_call.1} parent=1 // pred_check
      _
    $region19: #{tpu_custom_call.1} parent=1 // pred_check_branch
      %48 = sbr.rel (0) target = $region21
    $region20: #{tpu_custom_call.1} parent=1 // pred_region
      %s50 = ssub.s32 128, 128
      %51 = vsyncadd [#allocation4], %s50
      %s53 = sshll.u32 [#allocation7], 4
      %s54 = int_to_ptr.vmem [resolvable:$true] %s53
      %56 = dma.vmem_to_hbm [thread:$0]  %s54, 128, %s2, [#allocation4]
    $region21: #{tpu_custom_call.1} parent=1 // pred_fallthru
      _
    // Predicated region
    $region22: #{tpu_custom_call.1} parent=1 // pred_check
      _
    $region23: #{tpu_custom_call.1} parent=1 // pred_check_branch
      %58 = sbr.rel (0) target = $region25
    $region24: #{tpu_custom_call.1} parent=1 // pred_region
      %59 = dma.done [#allocation4], 128
    $region25: #{tpu_custom_call.1} parent=1 // pred_fallthru
      _
    %60 = vsyncpa [#allocation3], 1
    %61 = vsyncpa [#allocation6], 1
    %62 = vsyncpa [#allocation4], 1

</llo_original>
